<compile_context>
chip_gen: v5e
topology: v5e:2x2
jax: 0.10.0
libtpu: 0.0.40
codegen_flags: <defaults>
</compile_context>

<pallas_src>
import math

import jax
import jax.numpy as jnp
from jax import lax
from jax.experimental import pallas as pl
from jax.experimental.pallas import tpu as pltpu


_LANE = 128


def _round_up(v, m):
    return (v + m - 1) // m * m


def _vgae_kernel(w1_ref, w23_ref, x_ref, adj_ref, eps_ref,
                 mu_ref, logvar_ref, recon_ref):
    """Fused VGAE forward.

    Padded-zero invariants (all padding done with zeros):
      W1 is zero outside (F, H1), W23 zero outside its (H1, H2) blocks,
      x cols/rows beyond (H1, M) are 0, adj is zero outside (N, F), eps is
      zero outside (N, M).  Hence wx / h1 / mu / log_var are zero outside
      their true blocks (padded contraction terms vanish), exp(log_var)=1 in
      the pad but eps=0 there so z is zero outside (N, M), and recon is zero
      outside (N, N).
    """
    f32 = jnp.float32
    bf16 = jnp.bfloat16

    # adj feeds three dots -> cast to bf16 once (native MXU on v5e/v6e/v7x).
    adj = adj_ref[...].astype(bf16)                                    # (Np, Fp)

    # gc1: h1 = relu(adj @ (W1 @ x))        (weights are already bf16)
    wx = jnp.dot(w1_ref[...], x_ref[...].astype(bf16),
                 preferred_element_type=f32)                           # (Fp, Mp)
    h1 = jnp.maximum(
        jnp.dot(adj, wx.astype(bf16), preferred_element_type=f32), 0.0)  # (Np, Mp)

    # gc2/gc3 (identity act): one MXU pass for [W2; W3] @ h1 (linear in N,
    # no (N, 2N) quadratic intermediate), then mu / log_var = adj @ (.).
    h1_bf = h1.astype(bf16)
    w23h1 = jnp.dot(w23_ref[...], h1_bf, preferred_element_type=f32)   # (2*H1p, Mp)
    h1p = w23_ref.shape[0] // 2                                        # static
    mu = jnp.dot(adj, w23h1[:h1p].astype(bf16), preferred_element_type=f32)
    log_var = jnp.dot(adj, w23h1[h1p:].astype(bf16), preferred_element_type=f32)
    mu_ref[...] = mu
    logvar_ref[...] = log_var

    # reparameterize (training mode): z = eps * exp(log_var) + mu
    # (the reference uses exp(log_var), NOT exp(0.5 * log_var)).
    # Elementwise math stays f32: v5e's VPU/EUP have no bf16 support.
    z = eps_ref[...] * jnp.exp(log_var) + mu                           # (Np, Mp)

    # InnerProductDecoder with identity activation: recon = z @ z.T.
    # transposed-RHS dot_general -> MXU consumes z directly, no materialized
    # z.T copy.  TODO(synk): the reference InnerProductDecoder misspells
    # __init__, so its self.act is never stored; we implement the intended
    # identity activation.
    z_bf = z.astype(bf16)
    recon_ref[...] = lax.dot_general(
        z_bf, z_bf, dimension_numbers=(((1,), (1,)), ((), ())),
        preferred_element_type=f32)


def prepare_params(params):
    """One-time weight prep (hoisted out of the per-call hot path).

    Pads every axis to a multiple of 128 with zeros, packs W2/W3 as
    W23 = [W2; W3] (so gc2+gc3 share one MXU pass) and pre-casts to bf16.
    """
    w1, w2, w3 = params["w1"], params["w2"], params["w3"]
    F_, H1 = w1.shape
    H1b, H2 = w2.shape
    assert w3.shape == w2.shape and H1b == H1
    Fp = _round_up(F_, _LANE)
    H1p = _round_up(H1, _LANE)
    H2p = _round_up(H2, _LANE)
    w1_p = jnp.pad(w1, ((0, Fp - F_), (0, H1p - H1))).astype(jnp.bfloat16)
    w2_p = jnp.pad(w2, ((0, H1p - H1), (0, H2p - H2)))
    w3_p = jnp.pad(w3, ((0, H1p - H1), (0, H2p - H2)))
    w23 = jnp.concatenate([w2_p, w3_p], axis=0).astype(jnp.bfloat16)   # (2*H1p, H2p)
    return {"w1": w1_p, "w23": w23}


def vgae_forward(prepared, x, adj, eps):
    w1p, w23p = prepared["w1"], prepared["w23"]
    Fp, H1p = w1p.shape
    H2p = w23p.shape[1]
    Hx, M = x.shape
    N, F_ = adj.shape

    # reference shape algebra (see module docstring)
    assert Fp == H1p, "adj cols must equal in_feat == hidden_dim1"
    assert Hx == F_, "x rows must equal hidden_dim1 (== adj cols)"
    assert _round_up(F_, _LANE) == Fp
    assert eps.shape == (N, M)

    Mp = _round_up(M, _LANE)
    Np = _round_up(N, _LANE)
    assert Np == H2p, "num_nodes must equal hidden_dim2"

    # Per-call zero-padding of the activations (exact; see kernel docstring).
    # TODO(synk): at non-toy sizes replace these materialized HBM copies with
    # Pallas edge-block masking inside a tiled grid.
    x_p = jnp.pad(x, ((0, H1p - Hx), (0, Mp - M)))
    adj_p = jnp.pad(adj, ((0, Np - N), (0, Fp - F_)))
    eps_p = jnp.pad(eps, ((0, Np - N), (0, Mp - M)))

    # Generation-aware VMEM budget: query physical capacity, guard the
    # whole-array footprint against it, and pass an explicit limit so we do
    # not rely on the per-chip default scoped VMEM (16 MiB on v5e).
    f32b, bf16b = 4, 2
    buf_bytes = [
        # kernel inputs resident in VMEM
        w1p.size * bf16b, w23p.size * bf16b,
        H1p * Mp * f32b, Np * Fp * f32b, Np * Mp * f32b,
        # outputs (mu, log_var, recon)
        Np * Mp * f32b, Np * Mp * f32b, Np * Np * f32b,
        # f32 intermediates (wx, h1, w23h1, z)
        Fp * Mp * f32b, Np * Mp * f32b, 2 * H1p * Mp * f32b, Np * Mp * f32b,
        # bf16 casts of dot operands (adj, wx, h1, w2h1/w3h1 slices, z)
        Np * Fp * bf16b, Fp * Mp * bf16b, Np * Mp * bf16b,
        2 * H1p * Mp * bf16b, Np * Mp * bf16b,
    ]
    vmem_est = int(sum(buf_bytes))
    try:
        vmem_cap = int(pltpu.get_tpu_info().vmem_capacity_bytes)
    except Exception:
        vmem_cap = 64 * 1024 * 1024   # conservative fallback (v7x per-TC VMEM)
    vmem_limit = min(int(0.9 * vmem_cap), max(32 * 1024 * 1024, 4 * vmem_est))
    # 2x margin on the flat sum for Pallas copy buffers / compiler scratch.
    assert 2 * vmem_est <= vmem_limit, (
        f"VGAE whole-array path needs ~{2 * vmem_est} B of VMEM "
        f"(limit {vmem_limit} B, capacity {vmem_cap} B); use a tiled path")

    vspec = pl.BlockSpec(memory_space=pltpu.MemorySpace.VMEM)
    mu_p, logvar_p, recon_p = pl.pallas_call(
        _vgae_kernel,
        in_specs=[vspec, vspec, vspec, vspec, vspec],
        out_specs=(vspec, vspec, vspec),
        out_shape=(
            jax.ShapeDtypeStruct((Np, Mp), jnp.float32),   # mu (padded)
            jax.ShapeDtypeStruct((Np, Mp), jnp.float32),   # log_var (padded)
            jax.ShapeDtypeStruct((Np, Np), jnp.float32),   # recon (padded)
        ),
        compiler_params=pltpu.CompilerParams(vmem_limit_bytes=vmem_limit),
    )(w1p, w23p, x_p, adj_p, eps_p)

    return recon_p[:N, :N], mu_p[:N, :M], logvar_p[:N, :M]


def _vgae_reference(params, x, adj, eps):
    """Pure-JAX reference mirroring the PyTorch module (training mode).

    Uses HIGHEST matmul precision so it is a stable ~f32 baseline to compare
    the bf16-MXU kernel against.
    """
    w1, w2, w3 = params["w1"], params["w2"], params["w3"]
    hi = jax.lax.Precision.HIGHEST
    mm = lambda a, b: jnp.dot(a, b, precision=hi)
    h1 = jax.nn.relu(mm(adj, mm(w1, x)))
    mu = mm(adj, mm(w2, h1))
    log_var = mm(adj, mm(w3, h1))
    z = eps * jnp.exp(log_var) + mu
    return mm(z, z.T), mu, log_var


def _xavier_uniform(key, shape):
    fan_in, fan_out = shape
    bound = float((6.0 / (fan_in + fan_out)) ** 0.5)
    return jax.random.uniform(key, shape, jnp.float32, -bound, bound)


if __name__ == "__main__":
    key = jax.random.PRNGKey(0)
    k1, k2, k3, kx, ka, ke = jax.random.split(key, 6)

    # dims chosen to satisfy the reference's implicit constraints
    input_feat_dim = 32          # F  (== hidden_dim1 == adj cols)
    hidden_dim1 = 32             # H1
    hidden_dim2 = 16             # H2
    num_nodes = hidden_dim2      # N  (== hidden_dim2)
    M = 32                       # column dim of x
    # dropout prob = 0.0 -> F.dropout is identity, even in training mode

    params = {
        "w1": _xavier_uniform(k1, (input_feat_dim, hidden_dim1)),
        "w2": _xavier_uniform(k2, (hidden_dim1, hidden_dim2)),
        "w3": _xavier_uniform(k3, (hidden_dim1, hidden_dim2)),
    }
    x = jax.random.normal(kx, (hidden_dim1, M), jnp.float32)
    adj = jax.random.uniform(ka, (num_nodes, input_feat_dim), jnp.float32)
    adj = adj / jnp.sum(adj, axis=1, keepdims=True)      # row-normalized adjacency
    eps = jax.random.normal(ke, (num_nodes, M), jnp.float32)  # reparam noise

    prepared = prepare_params(params)                    # one-time weight prep
    fwd = jax.jit(vgae_forward)
    adj_recon, mu, log_var = fwd(prepared, x, adj, eps)
    jax.block_until_ready((adj_recon, mu, log_var))

    assert adj_recon.shape == (num_nodes, num_nodes)
    assert mu.shape == (num_nodes, M)
    assert log_var.shape == (num_nodes, M)

    # numeric sanity check against the f32 pure-JAX reference.  The kernel
    # feeds the MXU bf16 operands (by design), so tolerances are sized for
    # bf16 rounding: mu/log_var values are O(1e-2) with errors O(1e-3);
    # recon accumulates O(1) z products over M, so it gets a wider atol.
    r_ref, mu_ref, lv_ref = _vgae_reference(params, x, adj, eps)
    assert jnp.allclose(mu, mu_ref, rtol=2e-2, atol=2e-2)
    assert jnp.allclose(log_var, lv_ref, rtol=2e-2, atol=2e-2)
    assert jnp.allclose(adj_recon, r_ref, rtol=2e-2, atol=1e-1)

    print("KERNEL_OK")
</pallas_src>

<mosaic_0001>
module attributes {stable_mosaic.version = 11 : i64} {
  func.func @_vgae_kernel(%arg0: memref<128x128xbf16, #tpu.memory_space<vmem>>, %arg1: memref<256x128xbf16, #tpu.memory_space<vmem>>, %arg2: memref<128x128xf32, #tpu.memory_space<vmem>>, %arg3: memref<128x128xf32, #tpu.memory_space<vmem>>, %arg4: memref<128x128xf32, #tpu.memory_space<vmem>>, %arg5: memref<128x128xf32, #tpu.memory_space<vmem>>, %arg6: memref<128x128xf32, #tpu.memory_space<vmem>>, %arg7: memref<128x128xf32, #tpu.memory_space<vmem>>) attributes {dimension_semantics = [], scalar_prefetch = 0 : i64, scratch_operands = 0 : i64, tpu.core_type = #tpu.core_type<tc>} {
    %c0 = arith.constant 0 : index
    %c0_0 = arith.constant 0 : index
    %0 = vector.load %arg3[%c0, %c0_0] : memref<128x128xf32, #tpu.memory_space<vmem>>, vector<128x128xf32>
    %1 = arith.truncf %0 : vector<128x128xf32> to vector<128x128xbf16>
    %c0_1 = arith.constant 0 : index
    %c0_2 = arith.constant 0 : index
    %2 = vector.load %arg0[%c0_1, %c0_2] : memref<128x128xbf16, #tpu.memory_space<vmem>>, vector<128x128xbf16>
    %c0_3 = arith.constant 0 : index
    %c0_4 = arith.constant 0 : index
    %3 = vector.load %arg2[%c0_3, %c0_4] : memref<128x128xf32, #tpu.memory_space<vmem>>, vector<128x128xf32>
    %4 = arith.truncf %3 : vector<128x128xf32> to vector<128x128xbf16>
    %cst = arith.constant dense<0.000000e+00> : vector<128x128xf32>
    %5 = tpu.matmul %2, %4, %cst {dimension_numbers = #tpu.dot_dimension_numbers<[1], [0], [0], [1], [0, 0, 1, 1], [], []>} : vector<128x128xbf16>, vector<128x128xbf16>, vector<128x128xf32> -> vector<128x128xf32>
    %6 = arith.truncf %5 : vector<128x128xf32> to vector<128x128xbf16>
    %cst_5 = arith.constant dense<0.000000e+00> : vector<128x128xf32>
    %7 = tpu.matmul %1, %6, %cst_5 {dimension_numbers = #tpu.dot_dimension_numbers<[1], [0], [0], [1], [0, 0, 1, 1], [], []>} : vector<128x128xbf16>, vector<128x128xbf16>, vector<128x128xf32> -> vector<128x128xf32>
    %cst_6 = arith.constant 0.000000e+00 : f32
    %8 = vector.broadcast %cst_6 : f32 to vector<128x128xf32>
    %9 = arith.maximumf %7, %8 : vector<128x128xf32>
    %10 = arith.truncf %9 : vector<128x128xf32> to vector<128x128xbf16>
    %c0_7 = arith.constant 0 : index
    %c0_8 = arith.constant 0 : index
    %11 = vector.load %arg1[%c0_7, %c0_8] : memref<256x128xbf16, #tpu.memory_space<vmem>>, vector<256x128xbf16>
    %cst_9 = arith.constant dense<0.000000e+00> : vector<256x128xf32>
    %12 = tpu.matmul %11, %10, %cst_9 {dimension_numbers = #tpu.dot_dimension_numbers<[1], [0], [0], [1], [0, 0, 1, 1], [], []>} : vector<256x128xbf16>, vector<128x128xbf16>, vector<256x128xf32> -> vector<256x128xf32>
    %13 = vector.extract_strided_slice %12 {offsets = [0, 0], sizes = [128, 128], strides = [1, 1]} : vector<256x128xf32> to vector<128x128xf32>
    %14 = arith.truncf %13 : vector<128x128xf32> to vector<128x128xbf16>
    %cst_10 = arith.constant dense<0.000000e+00> : vector<128x128xf32>
    %15 = tpu.matmul %1, %14, %cst_10 {dimension_numbers = #tpu.dot_dimension_numbers<[1], [0], [0], [1], [0, 0, 1, 1], [], []>} : vector<128x128xbf16>, vector<128x128xbf16>, vector<128x128xf32> -> vector<128x128xf32>
    %16 = vector.extract_strided_slice %12 {offsets = [128, 0], sizes = [128, 128], strides = [1, 1]} : vector<256x128xf32> to vector<128x128xf32>
    %17 = arith.truncf %16 : vector<128x128xf32> to vector<128x128xbf16>
    %cst_11 = arith.constant dense<0.000000e+00> : vector<128x128xf32>
    %18 = tpu.matmul %1, %17, %cst_11 {dimension_numbers = #tpu.dot_dimension_numbers<[1], [0], [0], [1], [0, 0, 1, 1], [], []>} : vector<128x128xbf16>, vector<128x128xbf16>, vector<128x128xf32> -> vector<128x128xf32>
    %c0_12 = arith.constant 0 : index
    %c0_13 = arith.constant 0 : index
    %19 = vector.load %arg5[%c0_12, %c0_13] : memref<128x128xf32, #tpu.memory_space<vmem>>, vector<128x128xf32>
    tpu.vector_store %arg5[%c0_12, %c0_13], %15 {strides = array<i32>} : memref<128x128xf32, #tpu.memory_space<vmem>>, vector<128x128xf32>,
    %c0_14 = arith.constant 0 : index
    %c0_15 = arith.constant 0 : index
    %20 = vector.load %arg6[%c0_14, %c0_15] : memref<128x128xf32, #tpu.memory_space<vmem>>, vector<128x128xf32>
    tpu.vector_store %arg6[%c0_14, %c0_15], %18 {strides = array<i32>} : memref<128x128xf32, #tpu.memory_space<vmem>>, vector<128x128xf32>,
    %c0_16 = arith.constant 0 : index
    %c0_17 = arith.constant 0 : index
    %21 = vector.load %arg4[%c0_16, %c0_17] : memref<128x128xf32, #tpu.memory_space<vmem>>, vector<128x128xf32>
    %22 = math.exp %18 : vector<128x128xf32>
    %23 = arith.mulf %21, %22 : vector<128x128xf32>
    %24 = arith.addf %23, %15 : vector<128x128xf32>
    %25 = arith.truncf %24 : vector<128x128xf32> to vector<128x128xbf16>
    %cst_18 = arith.constant dense<0.000000e+00> : vector<128x128xf32>
    %26 = tpu.matmul %25, %25, %cst_18 {dimension_numbers = #tpu.dot_dimension_numbers<[1], [1], [0], [0], [0, 0, 1, 0], [], []>} : vector<128x128xbf16>, vector<128x128xbf16>, vector<128x128xf32> -> vector<128x128xf32>
    %c0_19 = arith.constant 0 : index
    %c0_20 = arith.constant 0 : index
    %27 = vector.load %arg7[%c0_19, %c0_20] : memref<128x128xf32, #tpu.memory_space<vmem>>, vector<128x128xf32>
    tpu.vector_store %arg7[%c0_19, %c0_20], %26 {strides = array<i32>} : memref<128x128xf32, #tpu.memory_space<vmem>>, vector<128x128xf32>,
    return
  }
}

</mosaic_0001>

<llo_original>
// kernel: vgae_forward.1
$region0: #{vgae_forward.1}
  #allocation0 [shape = 'u32[]', space=smem, size = 0x4, offset = 0x4, fixed_abs, tag = 'smem constant byte address 0x4 - core index']
  #allocation1 [shape = 'u32[72,128]{1,0:T(1,128)}', space=vmem, size = 0x9000, scoped, tag = 'internal scratch']
  %s0 = inlined_call_operand.vmem [shape: bf16[128,128], index: 0, kind: input, shape index: {}]
  %s1 = inlined_call_operand.vmem [shape: bf16[256,128], index: 1, kind: input, shape index: {}]
  %s2 = inlined_call_operand.vmem [shape: f32[128,128], index: 2, kind: input, shape index: {}]
  %s3 = inlined_call_operand.vmem [shape: f32[128,128], index: 3, kind: input, shape index: {}]
  %s4 = inlined_call_operand.vmem [shape: f32[128,128], index: 4, kind: input, shape index: {}]
  %s5 = inlined_call_operand.vmem [shape: f32[128,128], index: 5, kind: output, shape index: {0}]
  %s6 = inlined_call_operand.vmem [shape: f32[128,128], index: 6, kind: output, shape index: {1}]
  %s7 = inlined_call_operand.vmem [shape: f32[128,128], index: 7, kind: output, shape index: {2}]
  %8 = xla_tuple %s5, %s6, %s7
  %s9 = sld [smem:[#allocation0]]
  $region46: #{vgae_forward.1} parent=0
    _
  %s11 = ssub.s32 1, %s9
  %s12 = scalar_select 0, %s11, %s9
  // Predicated region
  $region2: #{vgae_forward.1} parent=0 // pred_check
    _
  $region3: #{vgae_forward.1} parent=0 // pred_check_branch
    %14 = sbr.rel (0) target = $region5
  $region4: #{vgae_forward.1} parent=0 // pred_region
    _
  $region5: #{vgae_forward.1} parent=0 // pred_fallthru
    _
  // Predicated region
  $region6: #{vgae_forward.1} parent=0 // pred_check
    _
  $region7: #{vgae_forward.1} parent=0 // pred_check_branch
    %16 = sbr.rel (0) target = $region9
  $region8: #{vgae_forward.1} parent=0 // pred_region
    _
  $region9: #{vgae_forward.1} parent=0 // pred_fallthru
    _
  // Predicated region
  $region10: #{vgae_forward.1} parent=0 // pred_check
    _
  $region11: #{vgae_forward.1} parent=0 // pred_check_branch
    %18 = sbr.rel (0) target = $region13
  $region12: #{vgae_forward.1} parent=0 // pred_region
    _
  $region13: #{vgae_forward.1} parent=0 // pred_fallthru
    _
  // Predicated region
  $region14: #{vgae_forward.1} parent=0 // pred_check
    _
  $region15: #{vgae_forward.1} parent=0 // pred_check_branch
    %20 = sbr.rel (0) target = $region17
  $region16: #{vgae_forward.1} parent=0 // pred_region
    _
  $region17: #{vgae_forward.1} parent=0 // pred_fallthru
    _
  // Predicated region
  $region18: #{vgae_forward.1} parent=0 // pred_check
    _
  $region19: #{vgae_forward.1} parent=0 // pred_check_branch
    %22 = sbr.rel (0) target = $region21
  $region20: #{vgae_forward.1} parent=0 // pred_region
    _
  $region21: #{vgae_forward.1} parent=0 // pred_fallthru
    _
  %v23 = vld [vmem:[%s3] sm:$0xff]
  %v24 = vld [vmem:[%s3 + $0x8] sm:$0xff]
  %v25 = vld [vmem:[%s3 + $0x10] sm:$0xff]
  %v26 = vld [vmem:[%s3 + $0x18] sm:$0xff]
  %v27 = vld [vmem:[%s3 + $0x20] sm:$0xff]
  %v28 = vld [vmem:[%s3 + $0x28] sm:$0xff]
  %v29 = vld [vmem:[%s3 + $0x30] sm:$0xff]
  %v30 = vld [vmem:[%s3 + $0x38] sm:$0xff]
  %v31 = vld [vmem:[%s3 + $0x40] sm:$0xff]
  %v32 = vld [vmem:[%s3 + $0x48] sm:$0xff]
  %v33 = vld [vmem:[%s3 + $0x50] sm:$0xff]
  %v34 = vld [vmem:[%s3 + $0x58] sm:$0xff]
  %v35 = vld [vmem:[%s3 + $0x60] sm:$0xff]
  %v36 = vld [vmem:[%s3 + $0x68] sm:$0xff]
  %v37 = vld [vmem:[%s3 + $0x70] sm:$0xff]
  %v38 = vld [vmem:[%s3 + $0x78] sm:$0xff]
  %v39 = vpack.c.bf16 %v24, %v23
  %v40 = vpack.c.bf16 %v26, %v25
  %v41 = vpack.c.bf16 %v28, %v27
  %v42 = vpack.c.bf16 %v30, %v29
  %v43 = vpack.c.bf16 %v32, %v31
  %v44 = vpack.c.bf16 %v34, %v33
  %v45 = vpack.c.bf16 %v36, %v35
  %v46 = vpack.c.bf16 %v38, %v37
  %v47 = vld [vmem:[%s0] sm:$0xf]
  %v48 = vld [vmem:[%s0 + $0x4] sm:$0xf]
  %v49 = vld [vmem:[%s0 + $0x8] sm:$0xf]
  %v50 = vld [vmem:[%s0 + $0xc] sm:$0xf]
  %v51 = vld [vmem:[%s0 + $0x10] sm:$0xf]
  %v52 = vld [vmem:[%s0 + $0x14] sm:$0xf]
  %v53 = vld [vmem:[%s0 + $0x18] sm:$0xf]
  %v54 = vld [vmem:[%s0 + $0x1c] sm:$0xf]
  %v55 = vld [vmem:[%s0 + $0x20] sm:$0xf]
  %v56 = vld [vmem:[%s0 + $0x24] sm:$0xf]
  %v57 = vld [vmem:[%s0 + $0x28] sm:$0xf]
  %v58 = vld [vmem:[%s0 + $0x2c] sm:$0xf]
  %v59 = vld [vmem:[%s0 + $0x30] sm:$0xf]
  %v60 = vld [vmem:[%s0 + $0x34] sm:$0xf]
  %v61 = vld [vmem:[%s0 + $0x38] sm:$0xf]
  %v62 = vld [vmem:[%s0 + $0x3c] sm:$0xf]
  %v63 = vld [vmem:[%s2] sm:$0xff]
  %v64 = vld [vmem:[%s2 + $0x8] sm:$0xff]
  %v65 = vld [vmem:[%s2 + $0x10] sm:$0xff]
  %v66 = vld [vmem:[%s2 + $0x18] sm:$0xff]
  %v67 = vld [vmem:[%s2 + $0x20] sm:$0xff]
  %v68 = vld [vmem:[%s2 + $0x28] sm:$0xff]
  %v69 = vld [vmem:[%s2 + $0x30] sm:$0xff]
  %v70 = vld [vmem:[%s2 + $0x38] sm:$0xff]
  %v71 = vld [vmem:[%s2 + $0x40] sm:$0xff]
  %v72 = vld [vmem:[%s2 + $0x48] sm:$0xff]
  %v73 = vld [vmem:[%s2 + $0x50] sm:$0xff]
  %v74 = vld [vmem:[%s2 + $0x58] sm:$0xff]
  %v75 = vld [vmem:[%s2 + $0x60] sm:$0xff]
  %v76 = vld [vmem:[%s2 + $0x68] sm:$0xff]
  %v77 = vld [vmem:[%s2 + $0x70] sm:$0xff]
  %v78 = vld [vmem:[%s2 + $0x78] sm:$0xff]
  %v79 = vpack.c.bf16 %v64, %v63
  %v80 = vpack.c.bf16 %v66, %v65
  %v81 = vpack.c.bf16 %v68, %v67
  %v82 = vpack.c.bf16 %v70, %v69
  %v83 = vpack.c.bf16 %v72, %v71
  %v84 = vpack.c.bf16 %v74, %v73
  %v85 = vpack.c.bf16 %v76, %v75
  %v86 = vpack.c.bf16 %v78, %v77
  %v103 = vunpack.c.l.b16 %v47
  %v104 = vunpack.c.l.b16 %v48
  %v105 = vunpack.c.l.b16 %v49
  %v106 = vunpack.c.l.b16 %v50
  %v107 = vunpack.c.l.b16 %v51
  %v108 = vunpack.c.l.b16 %v52
  %v109 = vunpack.c.l.b16 %v53
  %v110 = vunpack.c.l.b16 %v54
  %v111 = vunpack.c.l.b16 %v55
  %v112 = vunpack.c.l.b16 %v56
  %v113 = vunpack.c.l.b16 %v57
  %v114 = vunpack.c.l.b16 %v58
  %v115 = vunpack.c.l.b16 %v59
  %v116 = vunpack.c.l.b16 %v60
  %v117 = vunpack.c.l.b16 %v61
  %v118 = vunpack.c.l.b16 %v62
  %v119 = vpack.c.b16 %v104, %v103
  %v120 = vpack.c.b16 %v106, %v105
  %v121 = vpack.c.b16 %v108, %v107
  %v122 = vpack.c.b16 %v110, %v109
  %v123 = vpack.c.b16 %v112, %v111
  %v124 = vpack.c.b16 %v114, %v113
  %v125 = vpack.c.b16 %v116, %v115
  %v126 = vpack.c.b16 %v118, %v117
  %135 = vmatpush.bf16.msra.mxu0 %v86
  %136 = vmatpush.bf16.msra.mxu0 %v85
  %137 = vmatpush.bf16.msra.mxu0 %v84
  %138 = vmatpush.bf16.msra.mxu0 %v83
  %139 = vmatpush.bf16.msra.mxu0 %v82
  %140 = vmatpush.bf16.msra.mxu0 %v81
  %141 = vmatpush.bf16.msra.mxu0 %v80
  %142 = vmatpush.bf16.msra.mxu0 %v79
  %143 = vmatmul.bf16.gmra.mxu0 %v119
  %v144 = vpop.f32.mrf.mxu0
  %v145 = vadd.f32 0.0, %v144
  %v146 = vpop.f32.mrf.mxu0
  %v147 = vadd.f32 0.0, %v146
  %148 = vmatmul.bf16.gmra.mxu0 %v120
  %v149 = vpop.f32.mrf.mxu0
  %v150 = vadd.f32 0.0, %v149
  %v151 = vpop.f32.mrf.mxu0
  %v152 = vadd.f32 0.0, %v151
  %153 = vmatmul.bf16.gmra.mxu0 %v121
  %v154 = vpop.f32.mrf.mxu0
  %v155 = vadd.f32 0.0, %v154
  %v156 = vpop.f32.mrf.mxu0
  %v157 = vadd.f32 0.0, %v156
  %158 = vmatmul.bf16.gmra.mxu0 %v122
  %v159 = vpop.f32.mrf.mxu0
  %v160 = vadd.f32 0.0, %v159
  %v161 = vpop.f32.mrf.mxu0
  %v162 = vadd.f32 0.0, %v161
  %163 = vmatmul.bf16.gmra.mxu0 %v123
  %v164 = vpop.f32.mrf.mxu0
  %v165 = vadd.f32 0.0, %v164
  %v166 = vpop.f32.mrf.mxu0
  %v167 = vadd.f32 0.0, %v166
  %168 = vmatmul.bf16.gmra.mxu0 %v124
  %v169 = vpop.f32.mrf.mxu0
  %v170 = vadd.f32 0.0, %v169
  %v171 = vpop.f32.mrf.mxu0
  %v172 = vadd.f32 0.0, %v171
  %173 = vmatmul.bf16.gmra.mxu0 %v125
  %v174 = vpop.f32.mrf.mxu0
  %v175 = vadd.f32 0.0, %v174
  %v176 = vpop.f32.mrf.mxu0
  %v177 = vadd.f32 0.0, %v176
  %178 = vmatmul.bf16.gmra.mxu0 %v126
  %v179 = vpop.f32.mrf.mxu0
  %v180 = vadd.f32 0.0, %v179
  %v181 = vpop.f32.mrf.mxu0
  %v182 = vadd.f32 0.0, %v181
  %183 = vdwg.mxu0
  %v184 = vpack.c.bf16 %v147, %v145
  %v185 = vpack.c.bf16 %v152, %v150
  %v186 = vpack.c.bf16 %v157, %v155
  %v187 = vpack.c.bf16 %v162, %v160
  %v188 = vpack.c.bf16 %v167, %v165
  %v189 = vpack.c.bf16 %v172, %v170
  %v190 = vpack.c.bf16 %v177, %v175
  %v191 = vpack.c.bf16 %v182, %v180
  %192 = vmatpush.bf16.msra.mxu0 %v191
  %193 = vmatpush.bf16.msra.mxu0 %v190
  %194 = vmatpush.bf16.msra.mxu0 %v189
  %195 = vmatpush.bf16.msra.mxu0 %v188
  %196 = vmatpush.bf16.msra.mxu0 %v187
  %197 = vmatpush.bf16.msra.mxu0 %v186
  %198 = vmatpush.bf16.msra.mxu0 %v185
  %199 = vmatpush.bf16.msra.mxu0 %v184
  %200 = vmatmul.bf16.gmra.mxu0 %v39
  %v201 = vpop.f32.mrf.mxu0
  %v202 = vadd.f32 0.0, %v201
  %v203 = vpop.f32.mrf.mxu0
  %v204 = vadd.f32 0.0, %v203
  %205 = vmatmul.bf16.gmra.mxu0 %v40
  %v206 = vpop.f32.mrf.mxu0
  %v207 = vadd.f32 0.0, %v206
  %v208 = vpop.f32.mrf.mxu0
  %v209 = vadd.f32 0.0, %v208
  %210 = vmatmul.bf16.gmra.mxu0 %v41
  %v211 = vpop.f32.mrf.mxu0
  %v212 = vadd.f32 0.0, %v211
  %v213 = vpop.f32.mrf.mxu0
  %v214 = vadd.f32 0.0, %v213
  %215 = vmatmul.bf16.gmra.mxu0 %v42
  %v216 = vpop.f32.mrf.mxu0
  %v217 = vadd.f32 0.0, %v216
  %v218 = vpop.f32.mrf.mxu0
  %v219 = vadd.f32 0.0, %v218
  %220 = vmatmul.bf16.gmra.mxu0 %v43
  %v221 = vpop.f32.mrf.mxu0
  %v222 = vadd.f32 0.0, %v221
  %v223 = vpop.f32.mrf.mxu0
  %v224 = vadd.f32 0.0, %v223
  %225 = vmatmul.bf16.gmra.mxu0 %v44
  %v226 = vpop.f32.mrf.mxu0
  %v227 = vadd.f32 0.0, %v226
  %v228 = vpop.f32.mrf.mxu0
  %v229 = vadd.f32 0.0, %v228
  %230 = vmatmul.bf16.gmra.mxu0 %v45
  %v231 = vpop.f32.mrf.mxu0
  %v232 = vadd.f32 0.0, %v231
  %v233 = vpop.f32.mrf.mxu0
  %v234 = vadd.f32 0.0, %v233
  %235 = vmatmul.bf16.gmra.mxu0 %v46
  %v236 = vpop.f32.mrf.mxu0
  %v237 = vadd.f32 0.0, %v236
  %v238 = vpop.f32.mrf.mxu0
  %v239 = vadd.f32 0.0, %v238
  %240 = vdwg.mxu0
  %v241 = vmax.f32 %v202, 0.0
  %v242 = vmax.f32 %v204, 0.0
  %v243 = vmax.f32 %v207, 0.0
  %v244 = vmax.f32 %v209, 0.0
  %v245 = vmax.f32 %v212, 0.0
  %v246 = vmax.f32 %v214, 0.0
  %v247 = vmax.f32 %v217, 0.0
  %v248 = vmax.f32 %v219, 0.0
  %v249 = vmax.f32 %v222, 0.0
  %v250 = vmax.f32 %v224, 0.0
  %v251 = vmax.f32 %v227, 0.0
  %v252 = vmax.f32 %v229, 0.0
  %v253 = vmax.f32 %v232, 0.0
  %v254 = vmax.f32 %v234, 0.0
  %v255 = vmax.f32 %v237, 0.0
  %v256 = vmax.f32 %v239, 0.0
  %v257 = vpack.c.bf16 %v242, %v241
  %v258 = vpack.c.bf16 %v244, %v243
  %v259 = vpack.c.bf16 %v246, %v245
  %v260 = vpack.c.bf16 %v248, %v247
  %v261 = vpack.c.bf16 %v250, %v249
  %v262 = vpack.c.bf16 %v252, %v251
  %v263 = vpack.c.bf16 %v254, %v253
  %v264 = vpack.c.bf16 %v256, %v255
  %v265 = vld [vmem:[%s1] sm:$0xf]
  %v266 = vld [vmem:[%s1 + $0x4] sm:$0xf]
  %v267 = vld [vmem:[%s1 + $0x8] sm:$0xf]
  %v268 = vld [vmem:[%s1 + $0xc] sm:$0xf]
  %v269 = vld [vmem:[%s1 + $0x10] sm:$0xf]
  %v270 = vld [vmem:[%s1 + $0x14] sm:$0xf]
  %v271 = vld [vmem:[%s1 + $0x18] sm:$0xf]
  %v272 = vld [vmem:[%s1 + $0x1c] sm:$0xf]
  %v273 = vld [vmem:[%s1 + $0x20] sm:$0xf]
  %v274 = vld [vmem:[%s1 + $0x24] sm:$0xf]
  %v275 = vld [vmem:[%s1 + $0x28] sm:$0xf]
  %v276 = vld [vmem:[%s1 + $0x2c] sm:$0xf]
  %v277 = vld [vmem:[%s1 + $0x30] sm:$0xf]
  %v278 = vld [vmem:[%s1 + $0x34] sm:$0xf]
  %v279 = vld [vmem:[%s1 + $0x38] sm:$0xf]
  %v280 = vld [vmem:[%s1 + $0x3c] sm:$0xf]
  %v281 = vld [vmem:[%s1 + $0x40] sm:$0xf]
  %v282 = vld [vmem:[%s1 + $0x44] sm:$0xf]
  %v283 = vld [vmem:[%s1 + $0x48] sm:$0xf]
  %v284 = vld [vmem:[%s1 + $0x4c] sm:$0xf]
  %v285 = vld [vmem:[%s1 + $0x50] sm:$0xf]
  %v286 = vld [vmem:[%s1 + $0x54] sm:$0xf]
  %v287 = vld [vmem:[%s1 + $0x58] sm:$0xf]
  %v288 = vld [vmem:[%s1 + $0x5c] sm:$0xf]
  %v289 = vld [vmem:[%s1 + $0x60] sm:$0xf]
  %v290 = vld [vmem:[%s1 + $0x64] sm:$0xf]
  %v291 = vld [vmem:[%s1 + $0x68] sm:$0xf]
  %v292 = vld [vmem:[%s1 + $0x6c] sm:$0xf]
  %v293 = vld [vmem:[%s1 + $0x70] sm:$0xf]
  %v294 = vld [vmem:[%s1 + $0x74] sm:$0xf]
  %v295 = vld [vmem:[%s1 + $0x78] sm:$0xf]
  %v296 = vld [vmem:[%s1 + $0x7c] sm:$0xf]
  %v329 = vunpack.c.l.b16 %v265
  %v330 = vunpack.c.l.b16 %v266
  %v331 = vunpack.c.l.b16 %v267
  %v332 = vunpack.c.l.b16 %v268
  %v333 = vunpack.c.l.b16 %v269
  %v334 = vunpack.c.l.b16 %v270
  %v335 = vunpack.c.l.b16 %v271
  %v336 = vunpack.c.l.b16 %v272
  %v337 = vunpack.c.l.b16 %v273
  %v338 = vunpack.c.l.b16 %v274
  %v339 = vunpack.c.l.b16 %v275
  %v340 = vunpack.c.l.b16 %v276
  %v341 = vunpack.c.l.b16 %v277
  %v342 = vunpack.c.l.b16 %v278
  %v343 = vunpack.c.l.b16 %v279
  %v344 = vunpack.c.l.b16 %v280
  %v345 = vunpack.c.l.b16 %v281
  %v346 = vunpack.c.l.b16 %v282
  %v347 = vunpack.c.l.b16 %v283
  %v348 = vunpack.c.l.b16 %v284
  %v349 = vunpack.c.l.b16 %v285
  %v350 = vunpack.c.l.b16 %v286
  %v351 = vunpack.c.l.b16 %v287
  %v352 = vunpack.c.l.b16 %v288
  %v353 = vunpack.c.l.b16 %v289
  %v354 = vunpack.c.l.b16 %v290
  %v355 = vunpack.c.l.b16 %v291
  %v356 = vunpack.c.l.b16 %v292
  %v357 = vunpack.c.l.b16 %v293
  %v358 = vunpack.c.l.b16 %v294
  %v359 = vunpack.c.l.b16 %v295
  %v360 = vunpack.c.l.b16 %v296
  %v361 = vpack.c.b16 %v330, %v329
  %v362 = vpack.c.b16 %v332, %v331
  %v363 = vpack.c.b16 %v334, %v333
  %v364 = vpack.c.b16 %v336, %v335
  %v365 = vpack.c.b16 %v338, %v337
  %v366 = vpack.c.b16 %v340, %v339
  %v367 = vpack.c.b16 %v342, %v341
  %v368 = vpack.c.b16 %v344, %v343
  %v369 = vpack.c.b16 %v346, %v345
  %v370 = vpack.c.b16 %v348, %v347
  %v371 = vpack.c.b16 %v350, %v349
  %v372 = vpack.c.b16 %v352, %v351
  %v373 = vpack.c.b16 %v354, %v353
  %v374 = vpack.c.b16 %v356, %v355
  %v375 = vpack.c.b16 %v358, %v357
  %v376 = vpack.c.b16 %v360, %v359
  %393 = vmatpush.bf16.msra.mxu0 %v264
  %394 = vmatpush.bf16.msra.mxu0 %v263
  %395 = vmatpush.bf16.msra.mxu0 %v262
  %396 = vmatpush.bf16.msra.mxu0 %v261
  %397 = vmatpush.bf16.msra.mxu0 %v260
  %398 = vmatpush.bf16.msra.mxu0 %v259
  %399 = vmatpush.bf16.msra.mxu0 %v258
  %400 = vmatpush.bf16.msra.mxu0 %v257
  %401 = vmatmul.bf16.gmra.mxu0 %v361
  %v402 = vpop.f32.mrf.mxu0
  %v403 = vadd.f32 0.0, %v402
  %v404 = vpop.f32.mrf.mxu0
  %v405 = vadd.f32 0.0, %v404
  %406 = vmatmul.bf16.gmra.mxu0 %v362
  %v407 = vpop.f32.mrf.mxu0
  %v408 = vadd.f32 0.0, %v407
  %v409 = vpop.f32.mrf.mxu0
  %v410 = vadd.f32 0.0, %v409
  %411 = vmatmul.bf16.gmra.mxu0 %v363
  %v412 = vpop.f32.mrf.mxu0
  %v413 = vadd.f32 0.0, %v412
  %v414 = vpop.f32.mrf.mxu0
  %v415 = vadd.f32 0.0, %v414
  %416 = vmatmul.bf16.gmra.mxu0 %v364
  %v417 = vpop.f32.mrf.mxu0
  %v418 = vadd.f32 0.0, %v417
  %v419 = vpop.f32.mrf.mxu0
  %v420 = vadd.f32 0.0, %v419
  %421 = vmatmul.bf16.gmra.mxu0 %v365
  %v422 = vpop.f32.mrf.mxu0
  %v423 = vadd.f32 0.0, %v422
  %v424 = vpop.f32.mrf.mxu0
  %v425 = vadd.f32 0.0, %v424
  %426 = vmatmul.bf16.gmra.mxu0 %v366
  %v427 = vpop.f32.mrf.mxu0
  %v428 = vadd.f32 0.0, %v427
  %v429 = vpop.f32.mrf.mxu0
  %v430 = vadd.f32 0.0, %v429
  %431 = vmatmul.bf16.gmra.mxu0 %v367
  %v432 = vpop.f32.mrf.mxu0
  %v433 = vadd.f32 0.0, %v432
  %v434 = vpop.f32.mrf.mxu0
  %v435 = vadd.f32 0.0, %v434
  %436 = vmatmul.bf16.gmra.mxu0 %v368
  %v437 = vpop.f32.mrf.mxu0
  %v438 = vadd.f32 0.0, %v437
  %v439 = vpop.f32.mrf.mxu0
  %v440 = vadd.f32 0.0, %v439
  %441 = vmatmul.bf16.gmra.mxu0 %v369
  %v442 = vpop.f32.mrf.mxu0
  %v443 = vadd.f32 0.0, %v442
  %v444 = vpop.f32.mrf.mxu0
  %v445 = vadd.f32 0.0, %v444
  %446 = vmatmul.bf16.gmra.mxu0 %v370
  %v447 = vpop.f32.mrf.mxu0
  %v448 = vadd.f32 0.0, %v447
  %v449 = vpop.f32.mrf.mxu0
  %v450 = vadd.f32 0.0, %v449
  %451 = vmatmul.bf16.gmra.mxu0 %v371
  %v452 = vpop.f32.mrf.mxu0
  %v453 = vadd.f32 0.0, %v452
  %v454 = vpop.f32.mrf.mxu0
  %v455 = vadd.f32 0.0, %v454
  %456 = vmatmul.bf16.gmra.mxu0 %v372
  %v457 = vpop.f32.mrf.mxu0
  %v458 = vadd.f32 0.0, %v457
  %v459 = vpop.f32.mrf.mxu0
  %v460 = vadd.f32 0.0, %v459
  %461 = vmatmul.bf16.gmra.mxu0 %v373
  %v462 = vpop.f32.mrf.mxu0
  %v463 = vadd.f32 0.0, %v462
  %v464 = vpop.f32.mrf.mxu0
  %v465 = vadd.f32 0.0, %v464
  %466 = vmatmul.bf16.gmra.mxu0 %v374
  %v467 = vpop.f32.mrf.mxu0
  %v468 = vadd.f32 0.0, %v467
  %v469 = vpop.f32.mrf.mxu0
  %v470 = vadd.f32 0.0, %v469
  %471 = vmatmul.bf16.gmra.mxu0 %v375
  %v472 = vpop.f32.mrf.mxu0
  %v473 = vadd.f32 0.0, %v472
  %v474 = vpop.f32.mrf.mxu0
  %v475 = vadd.f32 0.0, %v474
  %476 = vmatmul.bf16.gmra.mxu0 %v376
  %v477 = vpop.f32.mrf.mxu0
  %v478 = vadd.f32 0.0, %v477
  %v479 = vpop.f32.mrf.mxu0
  %v480 = vadd.f32 0.0, %v479
  %481 = vdwg.mxu0
  %v482 = vpack.c.bf16 %v405, %v403
  %v483 = vpack.c.bf16 %v410, %v408
  %v484 = vpack.c.bf16 %v415, %v413
  %v485 = vpack.c.bf16 %v420, %v418
  %v486 = vpack.c.bf16 %v425, %v423
  %v487 = vpack.c.bf16 %v430, %v428
  %v488 = vpack.c.bf16 %v435, %v433
  %v489 = vpack.c.bf16 %v440, %v438
  %490 = vmatpush.bf16.msra.mxu0 %v489
  %491 = vmatpush.bf16.msra.mxu0 %v488
  %492 = vmatpush.bf16.msra.mxu0 %v487
  %493 = vmatpush.bf16.msra.mxu0 %v486
  %494 = vmatpush.bf16.msra.mxu0 %v485
  %495 = vmatpush.bf16.msra.mxu0 %v484
  %496 = vmatpush.bf16.msra.mxu0 %v483
  %497 = vmatpush.bf16.msra.mxu0 %v482
  %498 = vmatmul.bf16.gmra.mxu0 %v39
  %v499 = vpop.f32.mrf.mxu0
  %v500 = vadd.f32 0.0, %v499
  %v501 = vpop.f32.mrf.mxu0
  %v502 = vadd.f32 0.0, %v501
  %503 = vmatmul.bf16.gmra.mxu0 %v40
  %v504 = vpop.f32.mrf.mxu0
  %v505 = vadd.f32 0.0, %v504
  %v506 = vpop.f32.mrf.mxu0
  %v507 = vadd.f32 0.0, %v506
  %508 = vmatmul.bf16.gmra.mxu0 %v41
  %v509 = vpop.f32.mrf.mxu0
  %v510 = vadd.f32 0.0, %v509
  %v511 = vpop.f32.mrf.mxu0
  %v512 = vadd.f32 0.0, %v511
  %513 = vmatmul.bf16.gmra.mxu0 %v42
  %v514 = vpop.f32.mrf.mxu0
  %v515 = vadd.f32 0.0, %v514
  %v516 = vpop.f32.mrf.mxu0
  %v517 = vadd.f32 0.0, %v516
  %518 = vmatmul.bf16.gmra.mxu0 %v43
  %v519 = vpop.f32.mrf.mxu0
  %v520 = vadd.f32 0.0, %v519
  %v521 = vpop.f32.mrf.mxu0
  %v522 = vadd.f32 0.0, %v521
  %523 = vmatmul.bf16.gmra.mxu0 %v44
  %v524 = vpop.f32.mrf.mxu0
  %v525 = vadd.f32 0.0, %v524
  %v526 = vpop.f32.mrf.mxu0
  %v527 = vadd.f32 0.0, %v526
  %528 = vmatmul.bf16.gmra.mxu0 %v45
  %v529 = vpop.f32.mrf.mxu0
  %v530 = vadd.f32 0.0, %v529
  %v531 = vpop.f32.mrf.mxu0
  %v532 = vadd.f32 0.0, %v531
  %533 = vmatmul.bf16.gmra.mxu0 %v46
  %v534 = vpop.f32.mrf.mxu0
  %v535 = vadd.f32 0.0, %v534
  %v536 = vpop.f32.mrf.mxu0
  %v537 = vadd.f32 0.0, %v536
  %538 = vdwg.mxu0
  %v539 = vpack.c.bf16 %v445, %v443
  %v540 = vpack.c.bf16 %v450, %v448
  %v541 = vpack.c.bf16 %v455, %v453
  %v542 = vpack.c.bf16 %v460, %v458
  %v543 = vpack.c.bf16 %v465, %v463
  %v544 = vpack.c.bf16 %v470, %v468
  %v545 = vpack.c.bf16 %v475, %v473
  %v546 = vpack.c.bf16 %v480, %v478
  %547 = vmatpush.bf16.msra.mxu0 %v546
  %548 = vmatpush.bf16.msra.mxu0 %v545
  %549 = vmatpush.bf16.msra.mxu0 %v544
  %550 = vmatpush.bf16.msra.mxu0 %v543
  %551 = vmatpush.bf16.msra.mxu0 %v542
  %552 = vmatpush.bf16.msra.mxu0 %v541
  %553 = vmatpush.bf16.msra.mxu0 %v540
  %554 = vmatpush.bf16.msra.mxu0 %v539
  %555 = vmatmul.bf16.gmra.mxu0 %v39
  %v556 = vpop.f32.mrf.mxu0
  %v557 = vadd.f32 0.0, %v556
  %v558 = vpop.f32.mrf.mxu0
  %v559 = vadd.f32 0.0, %v558
  %560 = vmatmul.bf16.gmra.mxu0 %v40
  %v561 = vpop.f32.mrf.mxu0
  %v562 = vadd.f32 0.0, %v561
  %v563 = vpop.f32.mrf.mxu0
  %v564 = vadd.f32 0.0, %v563
  %565 = vmatmul.bf16.gmra.mxu0 %v41
  %v566 = vpop.f32.mrf.mxu0
  %v567 = vadd.f32 0.0, %v566
  %v568 = vpop.f32.mrf.mxu0
  %v569 = vadd.f32 0.0, %v568
  %570 = vmatmul.bf16.gmra.mxu0 %v42
  %v571 = vpop.f32.mrf.mxu0
  %v572 = vadd.f32 0.0, %v571
  %v573 = vpop.f32.mrf.mxu0
  %v574 = vadd.f32 0.0, %v573
  %575 = vmatmul.bf16.gmra.mxu0 %v43
  %v576 = vpop.f32.mrf.mxu0
  %v577 = vadd.f32 0.0, %v576
  %v578 = vpop.f32.mrf.mxu0
  %v579 = vadd.f32 0.0, %v578
  %580 = vmatmul.bf16.gmra.mxu0 %v44
  %v581 = vpop.f32.mrf.mxu0
  %v582 = vadd.f32 0.0, %v581
  %v583 = vpop.f32.mrf.mxu0
  %v584 = vadd.f32 0.0, %v583
  %585 = vmatmul.bf16.gmra.mxu0 %v45
  %v586 = vpop.f32.mrf.mxu0
  %v587 = vadd.f32 0.0, %v586
  %v588 = vpop.f32.mrf.mxu0
  %v589 = vadd.f32 0.0, %v588
  %590 = vmatmul.bf16.gmra.mxu0 %v46
  %v591 = vpop.f32.mrf.mxu0
  %v592 = vadd.f32 0.0, %v591
  %v593 = vpop.f32.mrf.mxu0
  %v594 = vadd.f32 0.0, %v593
  %595 = vdwg.mxu0
  %596 = vst [vmem:[%s5] sm:$0xff] %v500
  %597 = vst [vmem:[%s5 + $0x8] sm:$0xff] %v502
  %598 = vst [vmem:[%s5 + $0x10] sm:$0xff] %v505
  %599 = vst [vmem:[%s5 + $0x18] sm:$0xff] %v507
  %600 = vst [vmem:[%s5 + $0x20] sm:$0xff] %v510
  %601 = vst [vmem:[%s5 + $0x28] sm:$0xff] %v512
  %602 = vst [vmem:[%s5 + $0x30] sm:$0xff] %v515
  %603 = vst [vmem:[%s5 + $0x38] sm:$0xff] %v517
  %604 = vst [vmem:[%s5 + $0x40] sm:$0xff] %v520
  %605 = vst [vmem:[%s5 + $0x48] sm:$0xff] %v522
  %606 = vst [vmem:[%s5 + $0x50] sm:$0xff] %v525
  %607 = vst [vmem:[%s5 + $0x58] sm:$0xff] %v527
  %608 = vst [vmem:[%s5 + $0x60] sm:$0xff] %v530
  %609 = vst [vmem:[%s5 + $0x68] sm:$0xff] %v532
  %610 = vst [vmem:[%s5 + $0x70] sm:$0xff] %v535
  %611 = vst [vmem:[%s5 + $0x78] sm:$0xff] %v537
  %612 = vst [vmem:[%s6] sm:$0xff] %v557
  %613 = vst [vmem:[%s6 + $0x8] sm:$0xff] %v559
  %614 = vst [vmem:[%s6 + $0x10] sm:$0xff] %v562
  %615 = vst [vmem:[%s6 + $0x18] sm:$0xff] %v564
  %616 = vst [vmem:[%s6 + $0x20] sm:$0xff] %v567
  %617 = vst [vmem:[%s6 + $0x28] sm:$0xff] %v569
  %618 = vst [vmem:[%s6 + $0x30] sm:$0xff] %v572
  %619 = vst [vmem:[%s6 + $0x38] sm:$0xff] %v574
  %620 = vst [vmem:[%s6 + $0x40] sm:$0xff] %v577
  %621 = vst [vmem:[%s6 + $0x48] sm:$0xff] %v579
  %622 = vst [vmem:[%s6 + $0x50] sm:$0xff] %v582
  %623 = vst [vmem:[%s6 + $0x58] sm:$0xff] %v584
  %624 = vst [vmem:[%s6 + $0x60] sm:$0xff] %v587
  %625 = vst [vmem:[%s6 + $0x68] sm:$0xff] %v589
  %626 = vst [vmem:[%s6 + $0x70] sm:$0xff] %v592
  %627 = vst [vmem:[%s6 + $0x78] sm:$0xff] %v594
  %v628 = vld [vmem:[%s4] sm:$0xff]
  %v629 = vld [vmem:[%s4 + $0x8] sm:$0xff]
  %v630 = vld [vmem:[%s4 + $0x10] sm:$0xff]
  %v631 = vld [vmem:[%s4 + $0x18] sm:$0xff]
  %v632 = vld [vmem:[%s4 + $0x20] sm:$0xff]
  %v633 = vld [vmem:[%s4 + $0x28] sm:$0xff]
  %v634 = vld [vmem:[%s4 + $0x30] sm:$0xff]
  %v635 = vld [vmem:[%s4 + $0x38] sm:$0xff]
  %v636 = vld [vmem:[%s4 + $0x40] sm:$0xff]
  %v637 = vld [vmem:[%s4 + $0x48] sm:$0xff]
  %v638 = vld [vmem:[%s4 + $0x50] sm:$0xff]
  %v639 = vld [vmem:[%s4 + $0x58] sm:$0xff]
  %v640 = vld [vmem:[%s4 + $0x60] sm:$0xff]
  %v641 = vld [vmem:[%s4 + $0x68] sm:$0xff]
  %v642 = vld [vmem:[%s4 + $0x70] sm:$0xff]
  %v643 = vld [vmem:[%s4 + $0x78] sm:$0xff]
  %v644 = vmul.f32 %v557, 1.442695
  %v645 = vpow.pop %v644
  %v646 = vmul.f32 %v559, 1.442695
  %v647 = vpow.pop %v646
  %v648 = vmul.f32 %v562, 1.442695
  %v649 = vpow.pop %v648
  %v650 = vmul.f32 %v564, 1.442695
  %v651 = vpow.pop %v650
  %v652 = vmul.f32 %v567, 1.442695
  %v653 = vpow.pop %v652
  %v654 = vmul.f32 %v569, 1.442695
  %v655 = vpow.pop %v654
  %v656 = vmul.f32 %v572, 1.442695
  %v657 = vpow.pop %v656
  %v658 = vmul.f32 %v574, 1.442695
  %v659 = vpow.pop %v658
  %v660 = vmul.f32 %v577, 1.442695
  %v661 = vpow.pop %v660
  %v662 = vmul.f32 %v579, 1.442695
  %v663 = vpow.pop %v662
  %v664 = vmul.f32 %v582, 1.442695
  %v665 = vpow.pop %v664
  %v666 = vmul.f32 %v584, 1.442695
  %v667 = vpow.pop %v666
  %v668 = vmul.f32 %v587, 1.442695
  %v669 = vpow.pop %v668
  %v670 = vmul.f32 %v589, 1.442695
  %v671 = vpow.pop %v670
  %v672 = vmul.f32 %v592, 1.442695
  %v673 = vpow.pop %v672
  %v674 = vmul.f32 %v594, 1.442695
  %v675 = vpow.pop %v674
  %v676 = vmul.f32 %v628, %v645
  %v677 = vmul.f32 %v629, %v647
  %v678 = vmul.f32 %v630, %v649
  %v679 = vmul.f32 %v631, %v651
  %v680 = vmul.f32 %v632, %v653
  %v681 = vmul.f32 %v633, %v655
  %v682 = vmul.f32 %v634, %v657
  %v683 = vmul.f32 %v635, %v659
  %v684 = vmul.f32 %v636, %v661
  %v685 = vmul.f32 %v637, %v663
  %v686 = vmul.f32 %v638, %v665
  %v687 = vmul.f32 %v639, %v667
  %v688 = vmul.f32 %v640, %v669
  %v689 = vmul.f32 %v641, %v671
  %v690 = vmul.f32 %v642, %v673
  %v691 = vmul.f32 %v643, %v675
  %v692 = vadd.f32 %v676, %v500
  %v693 = vadd.f32 %v677, %v502
  %v694 = vadd.f32 %v678, %v505
  %v695 = vadd.f32 %v679, %v507
  %v696 = vadd.f32 %v680, %v510
  %v697 = vadd.f32 %v681, %v512
  %v698 = vadd.f32 %v682, %v515
  %v699 = vadd.f32 %v683, %v517
  %v700 = vadd.f32 %v684, %v520
  %v701 = vadd.f32 %v685, %v522
  %v702 = vadd.f32 %v686, %v525
  %v703 = vadd.f32 %v687, %v527
  %v704 = vadd.f32 %v688, %v530
  %v705 = vadd.f32 %v689, %v532
  %v706 = vadd.f32 %v690, %v535
  %v707 = vadd.f32 %v691, %v537
  %v708 = vpack.c.bf16 %v693, %v692
  %v709 = vpack.c.bf16 %v695, %v694
  %v710 = vpack.c.bf16 %v697, %v696
  %v711 = vpack.c.bf16 %v699, %v698
  %v712 = vpack.c.bf16 %v701, %v700
  %v713 = vpack.c.bf16 %v703, %v702
  %v714 = vpack.c.bf16 %v705, %v704
  %v715 = vpack.c.bf16 %v707, %v706
  %716 = vmatpush.bf16.xpose.msra.mxu0 %v715
  %717 = vmatpush.bf16.xpose.msra.mxu0 %v714
  %718 = vmatpush.bf16.xpose.msra.mxu0 %v713
  %719 = vmatpush.bf16.xpose.msra.mxu0 %v712
  %720 = vmatpush.bf16.xpose.msra.mxu0 %v711
  %721 = vmatpush.bf16.xpose.msra.mxu0 %v710
  %722 = vmatpush.bf16.xpose.msra.mxu0 %v709
  %723 = vmatpush.bf16.xpose.msra.mxu0 %v708
  %724 = vmatmul.bf16.gmra.mxu0 %v708
  %v725 = vpop.f32.mrf.mxu0
  %v726 = vadd.f32 0.0, %v725
  %v727 = vpop.f32.mrf.mxu0
  %v728 = vadd.f32 0.0, %v727
  %729 = vmatmul.bf16.gmra.mxu0 %v709
  %v730 = vpop.f32.mrf.mxu0
  %v731 = vadd.f32 0.0, %v730
  %v732 = vpop.f32.mrf.mxu0
  %v733 = vadd.f32 0.0, %v732
  %734 = vmatmul.bf16.gmra.mxu0 %v710
  %v735 = vpop.f32.mrf.mxu0
  %v736 = vadd.f32 0.0, %v735
  %v737 = vpop.f32.mrf.mxu0
  %v738 = vadd.f32 0.0, %v737
  %739 = vmatmul.bf16.gmra.mxu0 %v711
  %v740 = vpop.f32.mrf.mxu0
  %v741 = vadd.f32 0.0, %v740
  %v742 = vpop.f32.mrf.mxu0
  %v743 = vadd.f32 0.0, %v742
  %744 = vmatmul.bf16.gmra.mxu0 %v712
  %v745 = vpop.f32.mrf.mxu0
  %v746 = vadd.f32 0.0, %v745
  %v747 = vpop.f32.mrf.mxu0
  %v748 = vadd.f32 0.0, %v747
  %749 = vmatmul.bf16.gmra.mxu0 %v713
  %v750 = vpop.f32.mrf.mxu0
  %v751 = vadd.f32 0.0, %v750
  %v752 = vpop.f32.mrf.mxu0
  %v753 = vadd.f32 0.0, %v752
  %754 = vmatmul.bf16.gmra.mxu0 %v714
  %v755 = vpop.f32.mrf.mxu0
  %v756 = vadd.f32 0.0, %v755
  %v757 = vpop.f32.mrf.mxu0
  %v758 = vadd.f32 0.0, %v757
  %759 = vmatmul.bf16.gmra.mxu0 %v715
  %v760 = vpop.f32.mrf.mxu0
  %v761 = vadd.f32 0.0, %v760
  %v762 = vpop.f32.mrf.mxu0
  %v763 = vadd.f32 0.0, %v762
  %764 = vdwg.mxu0
  %765 = vst [vmem:[%s7] sm:$0xff] %v726
  %766 = vst [vmem:[%s7 + $0x8] sm:$0xff] %v728
  %767 = vst [vmem:[%s7 + $0x10] sm:$0xff] %v731
  %768 = vst [vmem:[%s7 + $0x18] sm:$0xff] %v733
  %769 = vst [vmem:[%s7 + $0x20] sm:$0xff] %v736
  %770 = vst [vmem:[%s7 + $0x28] sm:$0xff] %v738
  %771 = vst [vmem:[%s7 + $0x30] sm:$0xff] %v741
  %772 = vst [vmem:[%s7 + $0x38] sm:$0xff] %v743
  %773 = vst [vmem:[%s7 + $0x40] sm:$0xff] %v746
  %774 = vst [vmem:[%s7 + $0x48] sm:$0xff] %v748
  %775 = vst [vmem:[%s7 + $0x50] sm:$0xff] %v751
  %776 = vst [vmem:[%s7 + $0x58] sm:$0xff] %v753
  %777 = vst [vmem:[%s7 + $0x60] sm:$0xff] %v756
  %778 = vst [vmem:[%s7 + $0x68] sm:$0xff] %v758
  %779 = vst [vmem:[%s7 + $0x70] sm:$0xff] %v761
  %780 = vst [vmem:[%s7 + $0x78] sm:$0xff] %v763
  // Predicated region
  $region22: #{vgae_forward.1} parent=0 // pred_check
    _
  $region23: #{vgae_forward.1} parent=0 // pred_check_branch
    %782 = sbr.rel (0) target = $region25
  $region24: #{vgae_forward.1} parent=0 // pred_region
    _
  $region25: #{vgae_forward.1} parent=0 // pred_fallthru
    _
  // Predicated region
  $region26: #{vgae_forward.1} parent=0 // pred_check
    _
  $region27: #{vgae_forward.1} parent=0 // pred_check_branch
    %784 = sbr.rel (0) target = $region29
  $region28: #{vgae_forward.1} parent=0 // pred_region
    _
  $region29: #{vgae_forward.1} parent=0 // pred_fallthru
    _
  // Predicated region
  $region30: #{vgae_forward.1} parent=0 // pred_check
    _
  $region31: #{vgae_forward.1} parent=0 // pred_check_branch
    %786 = sbr.rel (0) target = $region33
  $region32: #{vgae_forward.1} parent=0 // pred_region
    _
  $region33: #{vgae_forward.1} parent=0 // pred_fallthru
    _
  // Predicated region
  $region34: #{vgae_forward.1} parent=0 // pred_check
    _
  $region35: #{vgae_forward.1} parent=0 // pred_check_branch
    %788 = sbr.rel (0) target = $region37
  $region36: #{vgae_forward.1} parent=0 // pred_region
    _
  $region37: #{vgae_forward.1} parent=0 // pred_fallthru
    _
  // Predicated region
  $region38: #{vgae_forward.1} parent=0 // pred_check
    _
  $region39: #{vgae_forward.1} parent=0 // pred_check_branch
    %790 = sbr.rel (0) target = $region41
  $region40: #{vgae_forward.1} parent=0 // pred_region
    _
  $region41: #{vgae_forward.1} parent=0 // pred_fallthru
    _
  // Predicated region
  $region42: #{vgae_forward.1} parent=0 // pred_check
    _
  $region43: #{vgae_forward.1} parent=0 // pred_check_branch
    %792 = sbr.rel (0) target = $region45
  $region44: #{vgae_forward.1} parent=0 // pred_region
    _
  $region45: #{vgae_forward.1} parent=0 // pred_fallthru
    _

</llo_original>
